<compile_context>
chip_gen: v5e
topology: v5e:2x2
jax: 0.10.0
libtpu: 0.0.40
codegen_flags: <defaults>
</compile_context>

<pallas_src>
import math

import jax
import jax.numpy as jnp
from jax.experimental import pallas as pl
from jax.experimental.pallas import tpu as pltpu


# ----------------------------------------------------------------------------
# Kernel: both encoder passes + join + output Linear on one batch tile.
# All tensors are [features, batch_tile] (batch on the lane axis).
# ----------------------------------------------------------------------------
def _make_siamese_kernel(num_layers):
    def kernel(*refs):
        # refs layout:
        #   x1, x2,
        #   (fc_w_i, fc_b_i) * num_layers,
        #   emb_w (BN-folded), emb_b (BN-folded),
        #   out_w_a, out_w_b, out_w_c, out_w_d, out_b,
        #   out
        x1_ref, x2_ref = refs[0], refs[1]
        idx = 2
        fc = []
        for _ in range(num_layers):
            fc.append((refs[idx], refs[idx + 1]))
            idx += 2
        w_emb, b_emb = refs[idx], refs[idx + 1]
        idx += 2
        w_oa, w_ob, w_oc, w_od, b_out = refs[idx:idx + 5]
        idx += 5
        out_ref = refs[idx]

        def encode(x_bf16):
            # x_bf16: [input_dim, bt]  (bf16)
            h = x_bf16
            for (w_ref, b_ref) in fc:
                # Linear -> Dropout(identity, eval) -> ReLU
                z = jnp.dot(w_ref[...], h, preferred_element_type=jnp.float32)
                z = z + b_ref[...]                              # bias broadcast along lanes
                h = jnp.maximum(z, 0.0).astype(jnp.bfloat16)    # ReLU in f32 (v5e-safe)
            # emb Linear with BatchNorm1d (eval) folded into weights/bias -> f32 embedding
            e = jnp.dot(w_emb[...], h, preferred_element_type=jnp.float32)
            return e + b_emb[...]                               # [twin_dim, bt], f32

        o1 = encode(x1_ref[...])
        o2 = encode(x2_ref[...])

        # join = cat([o1, o2, |o2-o1|, o1*o2], feature axis); the output Linear over
        # the concatenation is computed as four partial matmuls (no in-kernel concat).
        d = jnp.abs(o2 - o1)
        p = o1 * o2
        pred = jnp.dot(w_oa[...], o1.astype(jnp.bfloat16), preferred_element_type=jnp.float32)
        pred = pred + jnp.dot(w_ob[...], o2.astype(jnp.bfloat16), preferred_element_type=jnp.float32)
        pred = pred + jnp.dot(w_oc[...], d.astype(jnp.bfloat16), preferred_element_type=jnp.float32)
        pred = pred + jnp.dot(w_od[...], p.astype(jnp.bfloat16), preferred_element_type=jnp.float32)
        pred = pred + b_out[...]                                # [2, bt], f32 logits

        out_ref[...] = pred

    return kernel


def _choose_batch_tile(B):
    # Batch sits on the lane axis -> tile must be a multiple of 128.
    # Prefer a tile that still gives >= 4 grid steps so the BlockSpec pipeline
    # (prefetch i+1 / writeback i-1) has work to overlap.
    for t in (1024, 512, 256):
        if B >= 4 * t:
            return t
    return 128


# ----------------------------------------------------------------------------
# Wrapper: host-side layout prep (transpose, bf16 cast, BN fold, out-weight split),
# BlockSpecs, grid, vmem budget.
# ----------------------------------------------------------------------------
def simple_siamese_forward(x1, x2, params, *, batch_tile=None):
    B, input_dim = x1.shape
    assert x2.shape == (B, input_dim)
    num_layers = len(params["fc_w"])
    twin_dim = params["emb_w"].shape[0]
    out_dim = params["out_w"].shape[0]          # == 2 in SimpleSiamese

    if batch_tile is None:
        batch_tile = _choose_batch_tile(B)
    assert batch_tile % 128 == 0, "batch is on the lane axis; tile must be a multiple of 128"

    num_tiles = pl.cdiv(B, batch_tile)
    if num_tiles > 1 and num_tiles % 2 == 1:
        num_tiles += 1                          # even parallel grid -> both v7x TensorCores busy
    B_pad = num_tiles * batch_tile

    # ---- host-side prep -----------------------------------------------------
    def to_lane_major(x):
        xt = jnp.asarray(x, jnp.bfloat16).T                     # [input_dim, B]
        return jnp.pad(xt, ((0, 0), (0, B_pad - B)))            # zero-pad batch

    x1_t = to_lane_major(x1)
    x2_t = to_lane_major(x2)

    bf = lambda a: jnp.asarray(a, jnp.bfloat16)
    col = lambda v: jnp.asarray(v, jnp.float32).reshape(-1, 1)  # [out, 1] bias column

    flat = []
    for w, b in zip(params["fc_w"], params["fc_b"]):            # PyTorch layout [out, in]
        flat += [bf(w), col(b)]

    # Fold eval-mode BatchNorm1d into the emb Linear:  y = (Wx+b)*scale + shift
    scale = params["bn_gamma"] / jnp.sqrt(params["bn_var"] + params["bn_eps"])
    shift = params["bn_beta"] - params["bn_mean"] * scale
    w_emb = params["emb_w"] * scale[:, None]
    b_emb = params["emb_b"] * scale + shift
    flat += [bf(w_emb), col(b_emb)]

    # Split the output Linear weight [2, 4*twin_dim] into the four join blocks.
    w_out = params["out_w"]
    for k in range(4):
        flat.append(bf(w_out[:, k * twin_dim:(k + 1) * twin_dim]))
    flat.append(col(params["out_b"]))

    # ---- specs ----------------------------------------------------------------
    def rep_spec(a):
        # Grid-invariant parameter (constant index_map -> fetched once; full-array
        # block so the (8,128) divisibility rule does not apply).
        return pl.BlockSpec(a.shape, lambda i: (0, 0))

    in_specs = [pl.BlockSpec((input_dim, batch_tile), lambda i: (0, i)),
                pl.BlockSpec((input_dim, batch_tile), lambda i: (0, i))]
    in_specs += [rep_spec(a) for a in flat]
    out_spec = pl.BlockSpec((out_dim, batch_tile), lambda i: (0, i))  # lane-dense store

    # ---- explicit scoped-VMEM budget -----------------------------------------
    widths = [input_dim] + [int(w.shape[0]) for w in params["fc_w"]] + [twin_dim]
    x_tile_bytes = 2 * 2 * input_dim * batch_tile * 2       # 2 inputs x 2 buffers, bf16
    o_tile_bytes = 2 * out_dim * batch_tile * 4             # 2 buffers, f32
    param_bytes = 2 * sum(int(a.size) * a.dtype.itemsize for a in flat)
    act_bytes = 8 * max(widths) * batch_tile * 4            # live activation slack
    vmem_limit = int(min(64 * 2 ** 20,
                         x_tile_bytes + o_tile_bytes + param_bytes + act_bytes + (16 << 20)))

    out_t = pl.pallas_call(
        _make_siamese_kernel(num_layers),
        out_shape=jax.ShapeDtypeStruct((out_dim, B_pad), jnp.float32),
        grid_spec=pltpu.PrefetchScalarGridSpec(
            num_scalar_prefetch=0,
            grid=(num_tiles,),
            in_specs=in_specs,
            out_specs=out_spec,
        ),
        compiler_params=pltpu.CompilerParams(
            dimension_semantics=("parallel",),
            vmem_limit_bytes=vmem_limit,
        ),
    )(x1_t, x2_t, *flat)

    # back to PyTorch convention (batch, 2); trivial wrapper-side slice + transpose
    return out_t[:, :B].T


# ----------------------------------------------------------------------------
# Pure-JAX reference (f32, PyTorch layout) for a correctness check.
# ----------------------------------------------------------------------------
def reference_forward(x1, x2, params):
    def enc(x):
        h = jnp.asarray(x, jnp.float32)
        for w, b in zip(params["fc_w"], params["fc_b"]):
            h = jnp.maximum(h @ w.T + b, 0.0)
        e = h @ params["emb_w"].T + params["emb_b"]
        scale = params["bn_gamma"] / jnp.sqrt(params["bn_var"] + params["bn_eps"])
        return (e - params["bn_mean"]) * scale + params["bn_beta"]

    o1, o2 = enc(x1), enc(x2)
    j = jnp.concatenate([o1, o2, jnp.abs(o2 - o1), o1 * o2], axis=1)
    return j @ params["out_w"].T + params["out_b"]


# ----------------------------------------------------------------------------
# Deterministic parameter construction (PyTorch nn.Linear-style init, [out, in]).
# ----------------------------------------------------------------------------
def init_params(key, input_dim, twin_dim, hidden_dim, num_layers):
    def linear(k, fan_in, fan_out):
        kw, kb = jax.random.split(k)
        bound = 1.0 / math.sqrt(fan_in)
        w = jax.random.uniform(kw, (fan_out, fan_in), jnp.float32, -bound, bound)
        b = jax.random.uniform(kb, (fan_out,), jnp.float32, -bound, bound)
        return w, b

    dims = [input_dim] + [hidden_dim] * num_layers
    keys = jax.random.split(key, num_layers + 3)
    params = {"fc_w": [], "fc_b": []}
    for i in range(num_layers):
        w, b = linear(keys[i], dims[i], dims[i + 1])
        params["fc_w"].append(w)
        params["fc_b"].append(b)

    params["emb_w"], params["emb_b"] = linear(keys[num_layers], dims[-1], twin_dim)

    # BatchNorm1d(twin_dim) eval-mode buffers (non-trivial to exercise the fold).
    kb1, kb2, kb3, kb4 = jax.random.split(keys[num_layers + 1], 4)
    params["bn_gamma"] = jax.random.uniform(kb1, (twin_dim,), jnp.float32, 0.5, 1.5)
    params["bn_beta"] = jax.random.uniform(kb2, (twin_dim,), jnp.float32, -0.2, 0.2)
    params["bn_mean"] = jax.random.uniform(kb3, (twin_dim,), jnp.float32, -0.5, 0.5)
    params["bn_var"] = jax.random.uniform(kb4, (twin_dim,), jnp.float32, 0.5, 1.5)
    params["bn_eps"] = 1e-5

    # SimpleSiamese.out: Linear(4 * twin_dim, 2)
    params["out_w"], params["out_b"] = linear(keys[num_layers + 2], 4 * twin_dim, 2)
    return params


if __name__ == "__main__":
    # Small config consistent with the module (input_dim, args.twin_dim, MLP encoder).
    input_dim = 32
    twin_dim = 16
    hidden_dim = 32
    num_layers = 2
    batch = 8

    key = jax.random.PRNGKey(0)
    k1, k2, kp = jax.random.split(key, 3)
    x1 = jax.random.normal(k1, (batch, input_dim), jnp.float32)
    x2 = jax.random.normal(k2, (batch, input_dim), jnp.float32)
    params = init_params(kp, input_dim, twin_dim, hidden_dim, num_layers)

    pred = simple_siamese_forward(x1, x2, params)
    pred = jax.block_until_ready(pred)

    assert pred.shape == (batch, 2)
    assert bool(jnp.all(jnp.isfinite(pred)))

    ref = reference_forward(x1, x2, params)
    # Kernel uses bf16 weights/activations with f32 accumulation -> loose tolerance.
    assert bool(jnp.allclose(pred, ref, atol=2e-1, rtol=1e-1)), (pred, ref)

    print("KERNEL_OK")
</pallas_src>

<mosaic_0001>
module attributes {stable_mosaic.version = 11 : i64} {
  func.func @kernel(%arg0: i32, %arg1: memref<32x128xbf16, #tpu.memory_space<vmem>>, %arg2: memref<32x128xbf16, #tpu.memory_space<vmem>>, %arg3: memref<32x32xbf16, #tpu.memory_space<vmem>>, %arg4: memref<32x1xf32, #tpu.memory_space<vmem>>, %arg5: memref<32x32xbf16, #tpu.memory_space<vmem>>, %arg6: memref<32x1xf32, #tpu.memory_space<vmem>>, %arg7: memref<16x32xbf16, #tpu.memory_space<vmem>>, %arg8: memref<16x1xf32, #tpu.memory_space<vmem>>, %arg9: memref<2x16xbf16, #tpu.memory_space<vmem>>, %arg10: memref<2x16xbf16, #tpu.memory_space<vmem>>, %arg11: memref<2x16xbf16, #tpu.memory_space<vmem>>, %arg12: memref<2x16xbf16, #tpu.memory_space<vmem>>, %arg13: memref<2x1xf32, #tpu.memory_space<vmem>>, %arg14: memref<2x128xf32, #tpu.memory_space<vmem>>) attributes {dimension_semantics = [#tpu.dimension_semantics<parallel>], iteration_bounds = array<i64: 1>, scalar_prefetch = 0 : i64, scratch_operands = 0 : i64, tpu.core_type = #tpu.core_type<tc>, window_params = [{transform_indices = @transform_0, window_bounds = array<i64: 32, 128>}, {transform_indices = @transform_1, window_bounds = array<i64: 32, 128>}, {pipeline_mode = #tpu.pipeline_mode<synchronous>, transform_indices = @transform_2, window_bounds = array<i64: 32, 32>}, {pipeline_mode = #tpu.pipeline_mode<synchronous>, transform_indices = @transform_3, window_bounds = array<i64: 32, 1>}, {pipeline_mode = #tpu.pipeline_mode<synchronous>, transform_indices = @transform_4, window_bounds = array<i64: 32, 32>}, {pipeline_mode = #tpu.pipeline_mode<synchronous>, transform_indices = @transform_5, window_bounds = array<i64: 32, 1>}, {pipeline_mode = #tpu.pipeline_mode<synchronous>, transform_indices = @transform_6, window_bounds = array<i64: 16, 32>}, {pipeline_mode = #tpu.pipeline_mode<synchronous>, transform_indices = @transform_7, window_bounds = array<i64: 16, 1>}, {pipeline_mode = #tpu.pipeline_mode<synchronous>, transform_indices = @transform_8, window_bounds = array<i64: 2, 16>}, {pipeline_mode = #tpu.pipeline_mode<synchronous>, transform_indices = @transform_9, window_bounds = array<i64: 2, 16>}, {pipeline_mode = #tpu.pipeline_mode<synchronous>, transform_indices = @transform_10, window_bounds = array<i64: 2, 16>}, {pipeline_mode = #tpu.pipeline_mode<synchronous>, transform_indices = @transform_11, window_bounds = array<i64: 2, 16>}, {pipeline_mode = #tpu.pipeline_mode<synchronous>, transform_indices = @transform_12, window_bounds = array<i64: 2, 1>}, {transform_indices = @transform_13, window_bounds = array<i64: 2, 128>}]} {
    %c0 = arith.constant 0 : index
    %c0_0 = arith.constant 0 : index
    %0 = vector.load %arg1[%c0, %c0_0] : memref<32x128xbf16, #tpu.memory_space<vmem>>, vector<32x128xbf16>
    %c0_1 = arith.constant 0 : index
    %c0_2 = arith.constant 0 : index
    %1 = vector.load %arg3[%c0_1, %c0_2] : memref<32x32xbf16, #tpu.memory_space<vmem>>, vector<32x32xbf16>
    %cst = arith.constant dense<0.000000e+00> : vector<32x128xf32>
    %2 = tpu.matmul %1, %0, %cst {dimension_numbers = #tpu.dot_dimension_numbers<[1], [0], [0], [1], [0, 0, 1, 1], [], []>} : vector<32x32xbf16>, vector<32x128xbf16>, vector<32x128xf32> -> vector<32x128xf32>
    %c0_3 = arith.constant 0 : index
    %c0_4 = arith.constant 0 : index
    %3 = vector.load %arg4[%c0_3, %c0_4] : memref<32x1xf32, #tpu.memory_space<vmem>>, vector<32x1xf32>
    %4 = vector.broadcast %3 : vector<32x1xf32> to vector<32x128xf32>
    %5 = arith.addf %2, %4 : vector<32x128xf32>
    %cst_5 = arith.constant 0.000000e+00 : f32
    %6 = vector.broadcast %cst_5 : f32 to vector<32x128xf32>
    %7 = arith.maximumf %5, %6 : vector<32x128xf32>
    %8 = arith.truncf %7 : vector<32x128xf32> to vector<32x128xbf16>
    %c0_6 = arith.constant 0 : index
    %c0_7 = arith.constant 0 : index
    %9 = vector.load %arg5[%c0_6, %c0_7] : memref<32x32xbf16, #tpu.memory_space<vmem>>, vector<32x32xbf16>
    %cst_8 = arith.constant dense<0.000000e+00> : vector<32x128xf32>
    %10 = tpu.matmul %9, %8, %cst_8 {dimension_numbers = #tpu.dot_dimension_numbers<[1], [0], [0], [1], [0, 0, 1, 1], [], []>} : vector<32x32xbf16>, vector<32x128xbf16>, vector<32x128xf32> -> vector<32x128xf32>
    %c0_9 = arith.constant 0 : index
    %c0_10 = arith.constant 0 : index
    %11 = vector.load %arg6[%c0_9, %c0_10] : memref<32x1xf32, #tpu.memory_space<vmem>>, vector<32x1xf32>
    %12 = vector.broadcast %11 : vector<32x1xf32> to vector<32x128xf32>
    %13 = arith.addf %10, %12 : vector<32x128xf32>
    %cst_11 = arith.constant 0.000000e+00 : f32
    %14 = vector.broadcast %cst_11 : f32 to vector<32x128xf32>
    %15 = arith.maximumf %13, %14 : vector<32x128xf32>
    %16 = arith.truncf %15 : vector<32x128xf32> to vector<32x128xbf16>
    %c0_12 = arith.constant 0 : index
    %c0_13 = arith.constant 0 : index
    %17 = vector.load %arg7[%c0_12, %c0_13] : memref<16x32xbf16, #tpu.memory_space<vmem>>, vector<16x32xbf16>
    %cst_14 = arith.constant dense<0.000000e+00> : vector<16x128xf32>
    %18 = tpu.matmul %17, %16, %cst_14 {dimension_numbers = #tpu.dot_dimension_numbers<[1], [0], [0], [1], [0, 0, 1, 1], [], []>} : vector<16x32xbf16>, vector<32x128xbf16>, vector<16x128xf32> -> vector<16x128xf32>
    %c0_15 = arith.constant 0 : index
    %c0_16 = arith.constant 0 : index
    %19 = vector.load %arg8[%c0_15, %c0_16] : memref<16x1xf32, #tpu.memory_space<vmem>>, vector<16x1xf32>
    %20 = vector.broadcast %19 : vector<16x1xf32> to vector<16x128xf32>
    %21 = arith.addf %18, %20 : vector<16x128xf32>
    %c0_17 = arith.constant 0 : index
    %c0_18 = arith.constant 0 : index
    %22 = vector.load %arg2[%c0_17, %c0_18] : memref<32x128xbf16, #tpu.memory_space<vmem>>, vector<32x128xbf16>
    %c0_19 = arith.constant 0 : index
    %c0_20 = arith.constant 0 : index
    %23 = vector.load %arg3[%c0_19, %c0_20] : memref<32x32xbf16, #tpu.memory_space<vmem>>, vector<32x32xbf16>
    %cst_21 = arith.constant dense<0.000000e+00> : vector<32x128xf32>
    %24 = tpu.matmul %23, %22, %cst_21 {dimension_numbers = #tpu.dot_dimension_numbers<[1], [0], [0], [1], [0, 0, 1, 1], [], []>} : vector<32x32xbf16>, vector<32x128xbf16>, vector<32x128xf32> -> vector<32x128xf32>
    %c0_22 = arith.constant 0 : index
    %c0_23 = arith.constant 0 : index
    %25 = vector.load %arg4[%c0_22, %c0_23] : memref<32x1xf32, #tpu.memory_space<vmem>>, vector<32x1xf32>
    %26 = vector.broadcast %25 : vector<32x1xf32> to vector<32x128xf32>
    %27 = arith.addf %24, %26 : vector<32x128xf32>
    %cst_24 = arith.constant 0.000000e+00 : f32
    %28 = vector.broadcast %cst_24 : f32 to vector<32x128xf32>
    %29 = arith.maximumf %27, %28 : vector<32x128xf32>
    %30 = arith.truncf %29 : vector<32x128xf32> to vector<32x128xbf16>
    %c0_25 = arith.constant 0 : index
    %c0_26 = arith.constant 0 : index
    %31 = vector.load %arg5[%c0_25, %c0_26] : memref<32x32xbf16, #tpu.memory_space<vmem>>, vector<32x32xbf16>
    %cst_27 = arith.constant dense<0.000000e+00> : vector<32x128xf32>
    %32 = tpu.matmul %31, %30, %cst_27 {dimension_numbers = #tpu.dot_dimension_numbers<[1], [0], [0], [1], [0, 0, 1, 1], [], []>} : vector<32x32xbf16>, vector<32x128xbf16>, vector<32x128xf32> -> vector<32x128xf32>
    %c0_28 = arith.constant 0 : index
    %c0_29 = arith.constant 0 : index
    %33 = vector.load %arg6[%c0_28, %c0_29] : memref<32x1xf32, #tpu.memory_space<vmem>>, vector<32x1xf32>
    %34 = vector.broadcast %33 : vector<32x1xf32> to vector<32x128xf32>
    %35 = arith.addf %32, %34 : vector<32x128xf32>
    %cst_30 = arith.constant 0.000000e+00 : f32
    %36 = vector.broadcast %cst_30 : f32 to vector<32x128xf32>
    %37 = arith.maximumf %35, %36 : vector<32x128xf32>
    %38 = arith.truncf %37 : vector<32x128xf32> to vector<32x128xbf16>
    %c0_31 = arith.constant 0 : index
    %c0_32 = arith.constant 0 : index
    %39 = vector.load %arg7[%c0_31, %c0_32] : memref<16x32xbf16, #tpu.memory_space<vmem>>, vector<16x32xbf16>
    %cst_33 = arith.constant dense<0.000000e+00> : vector<16x128xf32>
    %40 = tpu.matmul %39, %38, %cst_33 {dimension_numbers = #tpu.dot_dimension_numbers<[1], [0], [0], [1], [0, 0, 1, 1], [], []>} : vector<16x32xbf16>, vector<32x128xbf16>, vector<16x128xf32> -> vector<16x128xf32>
    %c0_34 = arith.constant 0 : index
    %c0_35 = arith.constant 0 : index
    %41 = vector.load %arg8[%c0_34, %c0_35] : memref<16x1xf32, #tpu.memory_space<vmem>>, vector<16x1xf32>
    %42 = vector.broadcast %41 : vector<16x1xf32> to vector<16x128xf32>
    %43 = arith.addf %40, %42 : vector<16x128xf32>
    %44 = arith.subf %43, %21 : vector<16x128xf32>
    %45 = math.absf %44 : vector<16x128xf32>
    %46 = arith.mulf %21, %43 : vector<16x128xf32>
    %c0_36 = arith.constant 0 : index
    %c0_37 = arith.constant 0 : index
    %47 = vector.load %arg9[%c0_36, %c0_37] : memref<2x16xbf16, #tpu.memory_space<vmem>>, vector<2x16xbf16>
    %48 = arith.truncf %21 : vector<16x128xf32> to vector<16x128xbf16>
    %cst_38 = arith.constant dense<0.000000e+00> : vector<2x128xf32>
    %49 = tpu.matmul %47, %48, %cst_38 {dimension_numbers = #tpu.dot_dimension_numbers<[1], [0], [0], [1], [0, 0, 1, 1], [], []>} : vector<2x16xbf16>, vector<16x128xbf16>, vector<2x128xf32> -> vector<2x128xf32>
    %c0_39 = arith.constant 0 : index
    %c0_40 = arith.constant 0 : index
    %50 = vector.load %arg10[%c0_39, %c0_40] : memref<2x16xbf16, #tpu.memory_space<vmem>>, vector<2x16xbf16>
    %51 = arith.truncf %43 : vector<16x128xf32> to vector<16x128xbf16>
    %cst_41 = arith.constant dense<0.000000e+00> : vector<2x128xf32>
    %52 = tpu.matmul %50, %51, %cst_41 {dimension_numbers = #tpu.dot_dimension_numbers<[1], [0], [0], [1], [0, 0, 1, 1], [], []>} : vector<2x16xbf16>, vector<16x128xbf16>, vector<2x128xf32> -> vector<2x128xf32>
    %53 = arith.addf %49, %52 : vector<2x128xf32>
    %c0_42 = arith.constant 0 : index
    %c0_43 = arith.constant 0 : index
    %54 = vector.load %arg11[%c0_42, %c0_43] : memref<2x16xbf16, #tpu.memory_space<vmem>>, vector<2x16xbf16>
    %55 = arith.truncf %45 : vector<16x128xf32> to vector<16x128xbf16>
    %cst_44 = arith.constant dense<0.000000e+00> : vector<2x128xf32>
    %56 = tpu.matmul %54, %55, %cst_44 {dimension_numbers = #tpu.dot_dimension_numbers<[1], [0], [0], [1], [0, 0, 1, 1], [], []>} : vector<2x16xbf16>, vector<16x128xbf16>, vector<2x128xf32> -> vector<2x128xf32>
    %57 = arith.addf %53, %56 : vector<2x128xf32>
    %c0_45 = arith.constant 0 : index
    %c0_46 = arith.constant 0 : index
    %58 = vector.load %arg12[%c0_45, %c0_46] : memref<2x16xbf16, #tpu.memory_space<vmem>>, vector<2x16xbf16>
    %59 = arith.truncf %46 : vector<16x128xf32> to vector<16x128xbf16>
    %cst_47 = arith.constant dense<0.000000e+00> : vector<2x128xf32>
    %60 = tpu.matmul %58, %59, %cst_47 {dimension_numbers = #tpu.dot_dimension_numbers<[1], [0], [0], [1], [0, 0, 1, 1], [], []>} : vector<2x16xbf16>, vector<16x128xbf16>, vector<2x128xf32> -> vector<2x128xf32>
    %61 = arith.addf %57, %60 : vector<2x128xf32>
    %c0_48 = arith.constant 0 : index
    %c0_49 = arith.constant 0 : index
    %62 = vector.load %arg13[%c0_48, %c0_49] : memref<2x1xf32, #tpu.memory_space<vmem>>, vector<2x1xf32>
    %63 = vector.broadcast %62 : vector<2x1xf32> to vector<2x128xf32>
    %64 = arith.addf %61, %63 : vector<2x128xf32>
    %c0_50 = arith.constant 0 : index
    %c0_51 = arith.constant 0 : index
    %65 = vector.load %arg14[%c0_50, %c0_51] : memref<2x128xf32, #tpu.memory_space<vmem>>, vector<2x128xf32>
    tpu.vector_store %arg14[%c0_50, %c0_51], %64 {strides = array<i32>} : memref<2x128xf32, #tpu.memory_space<vmem>>, vector<2x128xf32>,
    return
  }
  func.func @transform_0(%arg0: i32) -> (i32, i32) {
    %c0_i32 = arith.constant 0 : i32
    %c0_i32_0 = arith.constant 0 : i32
    return %c0_i32, %arg0 : i32, i32
  }
  func.func @transform_1(%arg0: i32) -> (i32, i32) {
    %c0_i32 = arith.constant 0 : i32
    %c0_i32_0 = arith.constant 0 : i32
    return %c0_i32, %arg0 : i32, i32
  }
  func.func @transform_2(%arg0: i32) -> (i32, i32) {
    %c0_i32 = arith.constant 0 : i32
    %c0_i32_0 = arith.constant 0 : i32
    %c0_i32_1 = arith.constant 0 : i32
    return %c0_i32, %c0_i32_0 : i32, i32
  }
  func.func @transform_3(%arg0: i32) -> (i32, i32) {
    %c0_i32 = arith.constant 0 : i32
    %c0_i32_0 = arith.constant 0 : i32
    %c0_i32_1 = arith.constant 0 : i32
    return %c0_i32, %c0_i32_0 : i32, i32
  }
  func.func @transform_4(%arg0: i32) -> (i32, i32) {
    %c0_i32 = arith.constant 0 : i32
    %c0_i32_0 = arith.constant 0 : i32
    %c0_i32_1 = arith.constant 0 : i32
    return %c0_i32, %c0_i32_0 : i32, i32
  }
  func.func @transform_5(%arg0: i32) -> (i32, i32) {
    %c0_i32 = arith.constant 0 : i32
    %c0_i32_0 = arith.constant 0 : i32
    %c0_i32_1 = arith.constant 0 : i32
    return %c0_i32, %c0_i32_0 : i32, i32
  }
  func.func @transform_6(%arg0: i32) -> (i32, i32) {
    %c0_i32 = arith.constant 0 : i32
    %c0_i32_0 = arith.constant 0 : i32
    %c0_i32_1 = arith.constant 0 : i32
    return %c0_i32, %c0_i32_0 : i32, i32
  }
  func.func @transform_7(%arg0: i32) -> (i32, i32) {
    %c0_i32 = arith.constant 0 : i32
    %c0_i32_0 = arith.constant 0 : i32
    %c0_i32_1 = arith.constant 0 : i32
    return %c0_i32, %c0_i32_0 : i32, i32
  }
  func.func @transform_8(%arg0: i32) -> (i32, i32) {
    %c0_i32 = arith.constant 0 : i32
    %c0_i32_0 = arith.constant 0 : i32
    %c0_i32_1 = arith.constant 0 : i32
    return %c0_i32, %c0_i32_0 : i32, i32
  }
  func.func @transform_9(%arg0: i32) -> (i32, i32) {
    %c0_i32 = arith.constant 0 : i32
    %c0_i32_0 = arith.constant 0 : i32
    %c0_i32_1 = arith.constant 0 : i32
    return %c0_i32, %c0_i32_0 : i32, i32
  }
  func.func @transform_10(%arg0: i32) -> (i32, i32) {
    %c0_i32 = arith.constant 0 : i32
    %c0_i32_0 = arith.constant 0 : i32
    %c0_i32_1 = arith.constant 0 : i32
    return %c0_i32, %c0_i32_0 : i32, i32
  }
  func.func @transform_11(%arg0: i32) -> (i32, i32) {
    %c0_i32 = arith.constant 0 : i32
    %c0_i32_0 = arith.constant 0 : i32
    %c0_i32_1 = arith.constant 0 : i32
    return %c0_i32, %c0_i32_0 : i32, i32
  }
  func.func @transform_12(%arg0: i32) -> (i32, i32) {
    %c0_i32 = arith.constant 0 : i32
    %c0_i32_0 = arith.constant 0 : i32
    %c0_i32_1 = arith.constant 0 : i32
    return %c0_i32, %c0_i32_0 : i32, i32
  }
  func.func @transform_13(%arg0: i32) -> (i32, i32) {
    %c0_i32 = arith.constant 0 : i32
    %c0_i32_0 = arith.constant 0 : i32
    return %c0_i32, %arg0 : i32, i32
  }
}

</mosaic_0001>

<llo_original>
// kernel: tpu_custom_call.1
$region0: #{tpu_custom_call.1}
  #allocation0 [shape = 'u32[]', space=smem, size = 0x4, offset = 0x4, fixed_abs, tag = 'smem constant byte address 0x4 - core index']
  #allocation1 [shape = 'u32[72,128]{1,0:T(1,128)}', space=vmem, size = 0x9000, scoped, tag = 'internal scratch']
  %s0 = inlined_call_operand.vmem [shape: bf16[32,128], index: 0, kind: input, shape index: {}]
  %s1 = inlined_call_operand.vmem [shape: bf16[32,128], index: 1, kind: input, shape index: {}]
  %s2 = inlined_call_operand.vmem [shape: bf16[32,32], index: 2, kind: input, shape index: {}]
  %s3 = inlined_call_operand.vmem [shape: f32[32,1], index: 3, kind: input, shape index: {}]
  %s4 = inlined_call_operand.vmem [shape: bf16[32,32], index: 4, kind: input, shape index: {}]
  %s5 = inlined_call_operand.vmem [shape: f32[32,1], index: 5, kind: input, shape index: {}]
  %s6 = inlined_call_operand.vmem [shape: bf16[16,32], index: 6, kind: input, shape index: {}]
  %s7 = inlined_call_operand.vmem [shape: f32[16,1], index: 7, kind: input, shape index: {}]
  %s8 = inlined_call_operand.vmem [shape: bf16[2,16], index: 8, kind: input, shape index: {}]
  %s9 = inlined_call_operand.vmem [shape: bf16[2,16], index: 9, kind: input, shape index: {}]
  %s10 = inlined_call_operand.vmem [shape: bf16[2,16], index: 10, kind: input, shape index: {}]
  %s11 = inlined_call_operand.vmem [shape: bf16[2,16], index: 11, kind: input, shape index: {}]
  %s12 = inlined_call_operand.vmem [shape: f32[2,1], index: 12, kind: input, shape index: {}]
  %s13 = inlined_call_operand.hbm [shape: f32[2,128], index: 13, kind: output, shape index: {}]
  %s14 = sld [smem:[#allocation0]]
  $region62: #{tpu_custom_call.1} parent=0
    _
  %s16 = ssub.s32 1, %s14
  %s17 = scalar_select 0, %s16, %s14
  $region1: #{tpu_custom_call.1} parent=0
    #allocation2 [shape = 'u8[1024]{0}', space=vmem, size = 0x400, scoped, tag = 'output window, operand 0, single buffered']
    #allocation3 [shape = 's32[1]{0}', space=sflag, size = 0x4, scoped, tag = 'scoped memory for tpu_custom_call.1']
    %18 = vsyncpa [#allocation3], 0
    // Predicated region
    $region2: #{tpu_custom_call.1} parent=1 // pred_check
      _
    $region3: #{tpu_custom_call.1} parent=1 // pred_check_branch
      %20 = sbr.rel (0) target = $region5
    $region4: #{tpu_custom_call.1} parent=1 // pred_region
      _
    $region5: #{tpu_custom_call.1} parent=1 // pred_fallthru
      _
    // Predicated region
    $region6: #{tpu_custom_call.1} parent=1 // pred_check
      _
    $region7: #{tpu_custom_call.1} parent=1 // pred_check_branch
      %22 = sbr.rel (0) target = $region9
    $region8: #{tpu_custom_call.1} parent=1 // pred_region
      _
    $region9: #{tpu_custom_call.1} parent=1 // pred_fallthru
      _
    // Predicated region
    $region10: #{tpu_custom_call.1} parent=1 // pred_check
      _
    $region11: #{tpu_custom_call.1} parent=1 // pred_check_branch
      %24 = sbr.rel (0) target = $region13
    $region12: #{tpu_custom_call.1} parent=1 // pred_region
      _
    $region13: #{tpu_custom_call.1} parent=1 // pred_fallthru
      _
    // Predicated region
    $region14: #{tpu_custom_call.1} parent=1 // pred_check
      _
    $region15: #{tpu_custom_call.1} parent=1 // pred_check_branch
      %26 = sbr.rel (0) target = $region17
    $region16: #{tpu_custom_call.1} parent=1 // pred_region
      _
    $region17: #{tpu_custom_call.1} parent=1 // pred_fallthru
      _
    // Predicated region
    $region18: #{tpu_custom_call.1} parent=1 // pred_check
      _
    $region19: #{tpu_custom_call.1} parent=1 // pred_check_branch
      %28 = sbr.rel (0) target = $region21
    $region20: #{tpu_custom_call.1} parent=1 // pred_region
      _
    $region21: #{tpu_custom_call.1} parent=1 // pred_fallthru
      _
    // Predicated region
    $region22: #{tpu_custom_call.1} parent=1 // pred_check
      _
    $region23: #{tpu_custom_call.1} parent=1 // pred_check_branch
      %30 = sbr.rel (0) target = $region25
    $region24: #{tpu_custom_call.1} parent=1 // pred_region
      _
    $region25: #{tpu_custom_call.1} parent=1 // pred_fallthru
      _
    // Predicated region
    $region26: #{tpu_custom_call.1} parent=1 // pred_check
      _
    $region27: #{tpu_custom_call.1} parent=1 // pred_check_branch
      %32 = sbr.rel (0) target = $region29
    $region28: #{tpu_custom_call.1} parent=1 // pred_region
      _
    $region29: #{tpu_custom_call.1} parent=1 // pred_fallthru
      _
    // Predicated region
    $region30: #{tpu_custom_call.1} parent=1 // pred_check
      _
    $region31: #{tpu_custom_call.1} parent=1 // pred_check_branch
      %34 = sbr.rel (0) target = $region33
    $region32: #{tpu_custom_call.1} parent=1 // pred_region
      _
    $region33: #{tpu_custom_call.1} parent=1 // pred_fallthru
      _
    // Predicated region
    $region34: #{tpu_custom_call.1} parent=1 // pred_check
      _
    $region35: #{tpu_custom_call.1} parent=1 // pred_check_branch
      %36 = sbr.rel (0) target = $region37
    $region36: #{tpu_custom_call.1} parent=1 // pred_region
      _
    $region37: #{tpu_custom_call.1} parent=1 // pred_fallthru
      _
    // Predicated region
    $region38: #{tpu_custom_call.1} parent=1 // pred_check
      _
    $region39: #{tpu_custom_call.1} parent=1 // pred_check_branch
      %38 = sbr.rel (0) target = $region41
    $region40: #{tpu_custom_call.1} parent=1 // pred_region
      _
    $region41: #{tpu_custom_call.1} parent=1 // pred_fallthru
      _
    // Predicated region
    $region42: #{tpu_custom_call.1} parent=1 // pred_check
      _
    $region43: #{tpu_custom_call.1} parent=1 // pred_check_branch
      %40 = sbr.rel (0) target = $region45
    $region44: #{tpu_custom_call.1} parent=1 // pred_region
      _
    $region45: #{tpu_custom_call.1} parent=1 // pred_fallthru
      _
    // Predicated region
    $region46: #{tpu_custom_call.1} parent=1 // pred_check
      _
    $region47: #{tpu_custom_call.1} parent=1 // pred_check_branch
      %42 = sbr.rel (0) target = $region49
    $region48: #{tpu_custom_call.1} parent=1 // pred_region
      _
    $region49: #{tpu_custom_call.1} parent=1 // pred_fallthru
      _
    // Predicated region
    $region50: #{tpu_custom_call.1} parent=1 // pred_check
      _
    $region51: #{tpu_custom_call.1} parent=1 // pred_check_branch
      %44 = sbr.rel (0) target = $region53
    $region52: #{tpu_custom_call.1} parent=1 // pred_region
      _
    $region53: #{tpu_custom_call.1} parent=1 // pred_fallthru
      _
    %v46 = vld [vmem:[%s0] sm:$0xf]
    %v47 = vld [vmem:[%s0 + $0x4] sm:$0xf]
    %v48 = vld [vmem:[%s0 + $0x8] sm:$0xf]
    %v49 = vld [vmem:[%s0 + $0xc] sm:$0xf]
    %v50 = vld [vmem:[%s2] sm:$0xf]
    %v51 = vld [vmem:[%s2 + $0x4] sm:$0xf]
    %v52 = vld [vmem:[%s2 + $0x8] sm:$0xf]
    %v53 = vld [vmem:[%s2 + $0xc] sm:$0xf]
    %v54 = vld [vmem:[%s3] sm:$0xff]
    %v55 = vld [vmem:[%s3 + $0x8] sm:$0xff]
    %v56 = vld [vmem:[%s3 + $0x10] sm:$0xff]
    %v57 = vld [vmem:[%s3 + $0x18] sm:$0xff]
    %59 = vset.pattern.permute.xlu0 0
    %60 = vperm.xlu0 %59, %v54
    %v61 = vpop.permute.xlu0 %60
    %64 = vset.pattern.permute.xlu0 0
    %65 = vperm.xlu0 %64, %v55
    %v66 = vpop.permute.xlu0 %65
    %69 = vset.pattern.permute.xlu0 0
    %70 = vperm.xlu0 %69, %v56
    %v71 = vpop.permute.xlu0 %70
    %74 = vset.pattern.permute.xlu0 0
    %75 = vperm.xlu0 %74, %v57
    %v76 = vpop.permute.xlu0 %75
    %v82 = vunpack.c.l.b16 %v50
    %v83 = vunpack.c.l.b16 %v51
    %v84 = vunpack.c.l.b16 %v52
    %v85 = vunpack.c.l.b16 %v53
    %v86 = vpack.c.b16 %v83, %v82
    %v87 = vpack.c.b16 %v85, %v84
    %v92 = vunpack.c.l.b16 %v46
    %v93 = vunpack.c.l.b16 %v47
    %v94 = vunpack.c.l.b16 %v48
    %v95 = vunpack.c.l.b16 %v49
    %v96 = vpack.c.b16 %v93, %v92
    %v97 = vpack.c.b16 %v95, %v94
    %vm100 = vcmask 261120
    %v102 = vsel %vm100, %v86, 0
    %v105 = vsel %vm100, %v87, 0
    %107 = vmatpush.bf16.msra.mxu0 0
    %108 = vmatpush.bf16.msra.mxu0 0
    %109 = vmatpush.bf16.msra.mxu0 0
    %110 = vmatpush.bf16.msra.mxu0 0
    %111 = vmatpush.bf16.msra.mxu0 0
    %112 = vmatpush.bf16.msra.mxu0 0
    %113 = vmatpush.bf16.msra.mxu0 %v97
    %114 = vmatpush.bf16.msra.mxu0 %v96
    %115 = vmatmul.bf16.gmra.mxu0 %v102
    %v116 = vpop.f32.mrf.mxu0
    %v117 = vadd.f32 %v61, %v116
    %v118 = vpop.f32.mrf.mxu0
    %v119 = vadd.f32 %v66, %v118
    %120 = vmatmul.bf16.gmra.mxu0 %v105
    %v121 = vpop.f32.mrf.mxu0
    %v122 = vadd.f32 %v71, %v121
    %v123 = vpop.f32.mrf.mxu0
    %v124 = vadd.f32 %v76, %v123
    %125 = vdwg.mxu0
    %v126 = vmax.f32 %v117, 0.0
    %v127 = vmax.f32 %v119, 0.0
    %v128 = vmax.f32 %v122, 0.0
    %v129 = vmax.f32 %v124, 0.0
    %v130 = vpack.c.bf16 %v127, %v126
    %v131 = vpack.c.bf16 %v129, %v128
    %v132 = vld [vmem:[%s4] sm:$0xf]
    %v133 = vld [vmem:[%s4 + $0x4] sm:$0xf]
    %v134 = vld [vmem:[%s4 + $0x8] sm:$0xf]
    %v135 = vld [vmem:[%s4 + $0xc] sm:$0xf]
    %v136 = vld [vmem:[%s5] sm:$0xff]
    %v137 = vld [vmem:[%s5 + $0x8] sm:$0xff]
    %v138 = vld [vmem:[%s5 + $0x10] sm:$0xff]
    %v139 = vld [vmem:[%s5 + $0x18] sm:$0xff]
    %141 = vset.pattern.permute.xlu0 0
    %142 = vperm.xlu0 %141, %v136
    %v143 = vpop.permute.xlu0 %142
    %146 = vset.pattern.permute.xlu0 0
    %147 = vperm.xlu0 %146, %v137
    %v148 = vpop.permute.xlu0 %147
    %151 = vset.pattern.permute.xlu0 0
    %152 = vperm.xlu0 %151, %v138
    %v153 = vpop.permute.xlu0 %152
    %156 = vset.pattern.permute.xlu0 0
    %157 = vperm.xlu0 %156, %v139
    %v158 = vpop.permute.xlu0 %157
    %v164 = vunpack.c.l.b16 %v132
    %v165 = vunpack.c.l.b16 %v133
    %v166 = vunpack.c.l.b16 %v134
    %v167 = vunpack.c.l.b16 %v135
    %v168 = vpack.c.b16 %v165, %v164
    %v169 = vpack.c.b16 %v167, %v166
    %v171 = vsel %vm100, %v168, 0
    %v174 = vsel %vm100, %v169, 0
    %176 = vmatpush.bf16.msra.mxu0 0
    %177 = vmatpush.bf16.msra.mxu0 0
    %178 = vmatpush.bf16.msra.mxu0 0
    %179 = vmatpush.bf16.msra.mxu0 0
    %180 = vmatpush.bf16.msra.mxu0 0
    %181 = vmatpush.bf16.msra.mxu0 0
    %182 = vmatpush.bf16.msra.mxu0 %v131
    %183 = vmatpush.bf16.msra.mxu0 %v130
    %184 = vmatmul.bf16.gmra.mxu0 %v171
    %v185 = vpop.f32.mrf.mxu0
    %v186 = vadd.f32 %v143, %v185
    %v187 = vpop.f32.mrf.mxu0
    %v188 = vadd.f32 %v148, %v187
    %189 = vmatmul.bf16.gmra.mxu0 %v174
    %v190 = vpop.f32.mrf.mxu0
    %v191 = vadd.f32 %v153, %v190
    %v192 = vpop.f32.mrf.mxu0
    %v193 = vadd.f32 %v158, %v192
    %194 = vdwg.mxu0
    %v195 = vmax.f32 %v186, 0.0
    %v196 = vmax.f32 %v188, 0.0
    %v197 = vmax.f32 %v191, 0.0
    %v198 = vmax.f32 %v193, 0.0
    %v199 = vpack.c.bf16 %v196, %v195
    %v200 = vpack.c.bf16 %v198, %v197
    %v201 = vld [vmem:[%s6] sm:$0xf]
    %v202 = vld [vmem:[%s6 + $0x4] sm:$0xf]
    %v203 = vld [vmem:[%s7] sm:$0xff]
    %v204 = vld [vmem:[%s7 + $0x8] sm:$0xff]
    %206 = vset.pattern.permute.xlu0 0
    %207 = vperm.xlu0 %206, %v203
    %v208 = vpop.permute.xlu0 %207
    %211 = vset.pattern.permute.xlu0 0
    %212 = vperm.xlu0 %211, %v204
    %v213 = vpop.permute.xlu0 %212
    %v217 = vunpack.c.l.b16 %v201
    %v218 = vunpack.c.l.b16 %v202
    %v219 = vpack.c.b16 %v218, %v217
    %v221 = vsel %vm100, %v219, 0
    %223 = vmatpush.bf16.msra.mxu0 0
    %224 = vmatpush.bf16.msra.mxu0 0
    %225 = vmatpush.bf16.msra.mxu0 0
    %226 = vmatpush.bf16.msra.mxu0 0
    %227 = vmatpush.bf16.msra.mxu0 0
    %228 = vmatpush.bf16.msra.mxu0 0
    %229 = vmatpush.bf16.msra.mxu0 %v200
    %230 = vmatpush.bf16.msra.mxu0 %v199
    %231 = vmatmul.bf16.gmra.mxu0 %v221
    %v232 = vpop.f32.mrf.mxu0
    %v233 = vadd.f32 %v208, %v232
    %v234 = vpop.f32.mrf.mxu0
    %v235 = vadd.f32 %v213, %v234
    %236 = vdwg.mxu0
    %v237 = vld [vmem:[%s1] sm:$0xf]
    %v238 = vld [vmem:[%s1 + $0x4] sm:$0xf]
    %v239 = vld [vmem:[%s1 + $0x8] sm:$0xf]
    %v240 = vld [vmem:[%s1 + $0xc] sm:$0xf]
    %v245 = vunpack.c.l.b16 %v237
    %v246 = vunpack.c.l.b16 %v238
    %v247 = vunpack.c.l.b16 %v239
    %v248 = vunpack.c.l.b16 %v240
    %v249 = vpack.c.b16 %v246, %v245
    %v250 = vpack.c.b16 %v248, %v247
    %253 = vmatpush.bf16.msra.mxu0 0
    %254 = vmatpush.bf16.msra.mxu0 0
    %255 = vmatpush.bf16.msra.mxu0 0
    %256 = vmatpush.bf16.msra.mxu0 0
    %257 = vmatpush.bf16.msra.mxu0 0
    %258 = vmatpush.bf16.msra.mxu0 0
    %259 = vmatpush.bf16.msra.mxu0 %v250
    %260 = vmatpush.bf16.msra.mxu0 %v249
    %261 = vmatmul.bf16.gmra.mxu0 %v102
    %v262 = vpop.f32.mrf.mxu0
    %v263 = vadd.f32 %v61, %v262
    %v264 = vpop.f32.mrf.mxu0
    %v265 = vadd.f32 %v66, %v264
    %266 = vmatmul.bf16.gmra.mxu0 %v105
    %v267 = vpop.f32.mrf.mxu0
    %v268 = vadd.f32 %v71, %v267
    %v269 = vpop.f32.mrf.mxu0
    %v270 = vadd.f32 %v76, %v269
    %271 = vdwg.mxu0
    %v272 = vmax.f32 %v263, 0.0
    %v273 = vmax.f32 %v265, 0.0
    %v274 = vmax.f32 %v268, 0.0
    %v275 = vmax.f32 %v270, 0.0
    %v276 = vpack.c.bf16 %v273, %v272
    %v277 = vpack.c.bf16 %v275, %v274
    %278 = vmatpush.bf16.msra.mxu0 0
    %279 = vmatpush.bf16.msra.mxu0 0
    %280 = vmatpush.bf16.msra.mxu0 0
    %281 = vmatpush.bf16.msra.mxu0 0
    %282 = vmatpush.bf16.msra.mxu0 0
    %283 = vmatpush.bf16.msra.mxu0 0
    %284 = vmatpush.bf16.msra.mxu0 %v277
    %285 = vmatpush.bf16.msra.mxu0 %v276
    %286 = vmatmul.bf16.gmra.mxu0 %v171
    %v287 = vpop.f32.mrf.mxu0
    %v288 = vadd.f32 %v143, %v287
    %v289 = vpop.f32.mrf.mxu0
    %v290 = vadd.f32 %v148, %v289
    %291 = vmatmul.bf16.gmra.mxu0 %v174
    %v292 = vpop.f32.mrf.mxu0
    %v293 = vadd.f32 %v153, %v292
    %v294 = vpop.f32.mrf.mxu0
    %v295 = vadd.f32 %v158, %v294
    %296 = vdwg.mxu0
    %v297 = vmax.f32 %v288, 0.0
    %v298 = vmax.f32 %v290, 0.0
    %v299 = vmax.f32 %v293, 0.0
    %v300 = vmax.f32 %v295, 0.0
    %v301 = vpack.c.bf16 %v298, %v297
    %v302 = vpack.c.bf16 %v300, %v299
    %303 = vmatpush.bf16.msra.mxu0 0
    %304 = vmatpush.bf16.msra.mxu0 0
    %305 = vmatpush.bf16.msra.mxu0 0
    %306 = vmatpush.bf16.msra.mxu0 0
    %307 = vmatpush.bf16.msra.mxu0 0
    %308 = vmatpush.bf16.msra.mxu0 0
    %309 = vmatpush.bf16.msra.mxu0 %v302
    %310 = vmatpush.bf16.msra.mxu0 %v301
    %311 = vmatmul.bf16.gmra.mxu0 %v221
    %v312 = vpop.f32.mrf.mxu0
    %v313 = vadd.f32 %v208, %v312
    %v314 = vpop.f32.mrf.mxu0
    %v315 = vadd.f32 %v213, %v314
    %316 = vdwg.mxu0
    %v317 = vsub.f32 %v313, %v233
    %v318 = vsub.f32 %v315, %v235
    %v319 = vand.u32 2147483647, %v317
    %v320 = vand.u32 2147483647, %v318
    %v321 = vmul.f32 %v233, %v313
    %v322 = vmul.f32 %v235, %v315
    %v323 = vld [vmem:[%s8] sm:$0x1]
    %v324 = vpack.c.bf16 %v235, %v233
    %v325 = vld [vmem:[%s9] sm:$0x1]
    %v326 = vpack.c.bf16 %v315, %v313
    %vm327 = vcmask 130048
    %v329 = vsel %vm327, %v325, 0
    %331 = vmatpush.bf16.msra.mxu0 0
    %332 = vmatpush.bf16.msra.mxu0 0
    %333 = vmatpush.bf16.msra.mxu0 0
    %334 = vmatpush.bf16.msra.mxu0 0
    %335 = vmatpush.bf16.msra.mxu0 0
    %336 = vmatpush.bf16.msra.mxu0 0
    %337 = vmatpush.bf16.msra.mxu0 0
    %338 = vmatpush.bf16.msra.mxu0 %v326
    %339 = vmatmul.bf16.gmra.mxu0 %v329
    %v340 = vpop.f32.mrf.mxu0
    %v341 = vadd.f32 0.0, %v340
    %v342 = vpop.f32.mrf.mxu0
    %343 = vdwg.mxu0
    %v345 = vsel %vm327, %v323, 0
    %347 = vmatpush.bf16.msra.mxu0 0
    %348 = vmatpush.bf16.msra.mxu0 0
    %349 = vmatpush.bf16.msra.mxu0 0
    %350 = vmatpush.bf16.msra.mxu0 0
    %351 = vmatpush.bf16.msra.mxu0 0
    %352 = vmatpush.bf16.msra.mxu0 0
    %353 = vmatpush.bf16.msra.mxu0 0
    %354 = vmatpush.bf16.msra.mxu0 %v324
    %355 = vmatmul.bf16.gmra.mxu0 %v345
    %v356 = vpop.f32.mrf.mxu0
    %v357 = vadd.f32 %v341, %v356
    %v358 = vpop.f32.mrf.mxu0
    %359 = vdwg.mxu0
    %v360 = vld [vmem:[%s10] sm:$0x1]
    %v361 = vpack.c.bf16 %v320, %v319
    %v363 = vsel %vm327, %v360, 0
    %365 = vmatpush.bf16.msra.mxu0 0
    %366 = vmatpush.bf16.msra.mxu0 0
    %367 = vmatpush.bf16.msra.mxu0 0
    %368 = vmatpush.bf16.msra.mxu0 0
    %369 = vmatpush.bf16.msra.mxu0 0
    %370 = vmatpush.bf16.msra.mxu0 0
    %371 = vmatpush.bf16.msra.mxu0 0
    %372 = vmatpush.bf16.msra.mxu0 %v361
    %373 = vmatmul.bf16.gmra.mxu0 %v363
    %v374 = vpop.f32.mrf.mxu0
    %v375 = vadd.f32 0.0, %v374
    %v376 = vpop.f32.mrf.mxu0
    %377 = vdwg.mxu0
    %v378 = vadd.f32 %v357, %v375
    %v379 = vld [vmem:[%s11] sm:$0x1]
    %v380 = vpack.c.bf16 %v322, %v321
    %v382 = vsel %vm327, %v379, 0
    %384 = vmatpush.bf16.msra.mxu0 0
    %385 = vmatpush.bf16.msra.mxu0 0
    %386 = vmatpush.bf16.msra.mxu0 0
    %387 = vmatpush.bf16.msra.mxu0 0
    %388 = vmatpush.bf16.msra.mxu0 0
    %389 = vmatpush.bf16.msra.mxu0 0
    %390 = vmatpush.bf16.msra.mxu0 0
    %391 = vmatpush.bf16.msra.mxu0 %v380
    %392 = vmatmul.bf16.gmra.mxu0 %v382
    %v393 = vpop.f32.mrf.mxu0
    %v394 = vadd.f32 0.0, %v393
    %v395 = vpop.f32.mrf.mxu0
    %396 = vdwg.mxu0
    %v397 = vadd.f32 %v378, %v394
    %v398 = vld [vmem:[%s12] sm:$0x3]
    %400 = vset.pattern.permute.xlu0 0
    %401 = vperm.xlu0 %400, %v398
    %v402 = vpop.permute.xlu0 %401
    %v404 = vadd.f32 %v397, %v402
    %405 = vst [vmem:[#allocation2] sm:$0x3] %v404
    // Predicated region
    $region54: #{tpu_custom_call.1} parent=1 // pred_check
      _
    $region55: #{tpu_custom_call.1} parent=1 // pred_check_branch
      %407 = sbr.rel (0) target = $region57
    $region56: #{tpu_custom_call.1} parent=1 // pred_region
      %409 = vsyncadd [#allocation3], 0
      %s411 = sshll.u32 [#allocation2], 4
      %s412 = int_to_ptr.vmem [resolvable:$true] %s411
      %s413 = sshll.u32 %s13, 4
      %s414 = int_to_ptr.hbm [resolvable:$true] %s413
      %416 = dma.vmem_to_hbm [thread:$0]  %s412, 32, %s414, [#allocation3]
    $region57: #{tpu_custom_call.1} parent=1 // pred_fallthru
      _
    // Predicated region
    $region58: #{tpu_custom_call.1} parent=1 // pred_check
      _
    $region59: #{tpu_custom_call.1} parent=1 // pred_check_branch
      %418 = sbr.rel (0) target = $region61
    $region60: #{tpu_custom_call.1} parent=1 // pred_region
      %420 = dma.done [#allocation3], 32
    $region61: #{tpu_custom_call.1} parent=1 // pred_fallthru
      _
    %421 = vsyncpa [#allocation3], 1

</llo_original>
